<compile_context>
chip_gen: v5e
topology: v5e:2x2
jax: 0.10.0
libtpu: 0.0.40
codegen_flags: <defaults>
</compile_context>

<pallas_src>
import functools

import jax
import jax.numpy as jnp
from jax.experimental import pallas as pl
from jax.experimental.pallas import tpu as pltpu

BN_EPS = 1e-5
OUT_PAD = 128          # lane-dense padded output width (true output width = 2)
MAX_TB = 2048          # max batch-tile rows; ~2 MiB of double-buffered VMEM traffic


def _round_up(n, m):
    return ((n + m - 1) // m) * m


def mlp_kernel(x_ref,
               w1_ref, b1_ref,
               w2_ref, b2_ref,
               w3_ref, b3_ref,
               w4_ref, b4_ref,
               o_ref):
    # BN already folded into (w1,b1)/(w2,b2); dropout is identity in eval mode.
    # Matmuls: bf16 operands + f32 accumulation (MXU-native). Bias/ReLU in f32.
    x = x_ref[...]                                                     # (TB, D) bf16
    h = jnp.dot(x, w1_ref[...], preferred_element_type=jnp.float32) + b1_ref[...]
    h = jnp.maximum(h, 0.0)
    h = jnp.dot(h.astype(jnp.bfloat16), w2_ref[...],
                preferred_element_type=jnp.float32) + b2_ref[...]
    h = jnp.maximum(h, 0.0)
    h = jnp.dot(h.astype(jnp.bfloat16), w3_ref[...],
                preferred_element_type=jnp.float32) + b3_ref[...]
    h = jnp.maximum(h, 0.0)
    out = jnp.dot(h.astype(jnp.bfloat16), w4_ref[...],
                  preferred_element_type=jnp.float32) + b4_ref[...]
    o_ref[...] = out                                                   # (TB, 128) f32, unmasked store


def _fold_bn_and_pack(params):
    """Fold eval-mode BN into the preceding Linear; pad layer 4 to 128 lanes."""
    s1 = params["g1"] * jax.lax.rsqrt(params["v1"] + BN_EPS)           # (1, 128)
    w1 = params["w1"] * s1
    b1 = (params["b1"] - params["m1"]) * s1 + params["be1"]

    s2 = params["g2"] * jax.lax.rsqrt(params["v2"] + BN_EPS)           # (1, 64)
    w2 = params["w2"] * s2
    b2 = (params["b2"] - params["m2"]) * s2 + params["be2"]

    w4 = jnp.zeros((params["w4"].shape[0], OUT_PAD), jnp.float32).at[:, :2].set(params["w4"])
    b4 = jnp.zeros((1, OUT_PAD), jnp.float32).at[:, :2].set(params["b4"])

    bf16 = lambda w: w.astype(jnp.bfloat16)
    return (bf16(w1), b1,
            bf16(w2), b2,
            bf16(params["w3"]), params["b3"],
            bf16(w4), b4)


@functools.partial(jax.jit, static_argnames=("tb",))
def improved_predictor_forward(x, params, tb=MAX_TB):
    """x: (B, input_dim) float32. params: dict of weights (see init_params)."""
    B, D = x.shape
    w1, b1, w2, b2, w3, b3, w4, b4 = _fold_bn_and_pack(params)

    # Batch tile: multiple of 8 sublanes, capped at MAX_TB; pad B to a TB multiple.
    TB = min(tb, _round_up(B, 8))
    Bp = _round_up(B, TB)
    x_p = x if Bp == B else jnp.pad(x, ((0, Bp - B), (0, 0)))
    x_p = x_p.astype(jnp.bfloat16)

    resident = lambda shape: pl.BlockSpec(shape, lambda i: (0, 0))      # stays in VMEM across steps

    out = pl.pallas_call(
        mlp_kernel,
        out_shape=jax.ShapeDtypeStruct((Bp, OUT_PAD), jnp.float32),
        grid_spec=pltpu.PrefetchScalarGridSpec(
            num_scalar_prefetch=0,
            grid=(Bp // TB,),
            in_specs=[
                pl.BlockSpec((TB, D), lambda i: (i, 0)),               # x tile
                resident(w1.shape), resident(b1.shape),
                resident(w2.shape), resident(b2.shape),
                resident(w3.shape), resident(b3.shape),
                resident(w4.shape), resident(b4.shape),
            ],
            out_specs=pl.BlockSpec((TB, OUT_PAD), lambda i: (i, 0)),
        ),
        compiler_params=pltpu.CompilerParams(
            dimension_semantics=("parallel",),   # v7x: shard batch tiles across both TCs
            vmem_limit_bytes=32 * 1024 * 1024,   # safe scoped limit on v5e/v6e/v7x
        ),
    )(x_p, w1, b1, w2, b2, w3, b3, w4, b4)

    return out[:B, :2]


def init_params(key, input_dim):
    """Deterministic synthetic parameters matching the PyTorch module's shapes.

    Linear weights stored already-transposed as (in, out) so the kernel computes
    x @ W (PyTorch stores (out, in) and does x @ W.T — same math). Biases / BN
    vectors kept 2-D (1, n) for TPU lane layout.
    """
    ks = jax.random.split(key, 12)
    s = 0.1
    p = {}
    # Layer 1: Linear(input_dim, 128) + BatchNorm1d(128)
    p["w1"] = jax.random.normal(ks[0], (input_dim, 128), jnp.float32) * s
    p["b1"] = jax.random.normal(ks[1], (1, 128), jnp.float32) * s
    p["g1"] = 1.0 + jax.random.normal(ks[2], (1, 128), jnp.float32) * s
    p["be1"] = jax.random.normal(ks[3], (1, 128), jnp.float32) * s
    p["m1"] = jax.random.normal(ks[4], (1, 128), jnp.float32) * s
    p["v1"] = 1.0 + jnp.abs(jax.random.normal(ks[5], (1, 128), jnp.float32)) * s
    # Layer 2: Linear(128, 64) + BatchNorm1d(64)
    p["w2"] = jax.random.normal(ks[6], (128, 64), jnp.float32) * s
    p["b2"] = jax.random.normal(ks[7], (1, 64), jnp.float32) * s
    p["g2"] = 1.0 + jax.random.normal(ks[8], (1, 64), jnp.float32) * s
    p["be2"] = jax.random.normal(ks[9], (1, 64), jnp.float32) * s
    p["m2"] = jax.random.normal(ks[10], (1, 64), jnp.float32) * s
    p["v2"] = 1.0 + jnp.abs(jax.random.normal(ks[11], (1, 64), jnp.float32)) * s
    # Layer 3: Linear(64, 32)
    k3a, k3b, k4a, k4b = jax.random.split(jax.random.fold_in(key, 99), 4)
    p["w3"] = jax.random.normal(k3a, (64, 32), jnp.float32) * s
    p["b3"] = jax.random.normal(k3b, (1, 32), jnp.float32) * s
    # Layer 4: Linear(32, 2)
    p["w4"] = jax.random.normal(k4a, (32, 2), jnp.float32) * s
    p["b4"] = jax.random.normal(k4b, (1, 2), jnp.float32) * s
    return p


def reference_forward(x, p):
    """Pure-JAX f32 reference (eval-mode semantics, unfolded BN)."""
    h = x @ p["w1"] + p["b1"]
    h = (h - p["m1"]) / jnp.sqrt(p["v1"] + BN_EPS) * p["g1"] + p["be1"]
    h = jnp.maximum(h, 0.0)
    h = h @ p["w2"] + p["b2"]
    h = (h - p["m2"]) / jnp.sqrt(p["v2"] + BN_EPS) * p["g2"] + p["be2"]
    h = jnp.maximum(h, 0.0)
    h = jnp.maximum(h @ p["w3"] + p["b3"], 0.0)
    return h @ p["w4"] + p["b4"]


if __name__ == "__main__":
    key = jax.random.PRNGKey(0)
    k_x, k_p = jax.random.split(key)

    batch, input_dim = 8, 32
    x = jax.random.normal(k_x, (batch, input_dim), jnp.float32)
    params = init_params(k_p, input_dim)

    out = improved_predictor_forward(x, params)
    out = jax.block_until_ready(out)

    ref = reference_forward(x, params)
    assert out.shape == (batch, 2), out.shape
    # bf16 MXU operands (f32 accumulation) vs f32 reference -> loosened tolerance.
    assert jnp.allclose(out, ref, atol=2e-2, rtol=2e-2), "mismatch vs reference"

    print("KERNEL_OK")
</pallas_src>

<mosaic_0001>
module attributes {stable_mosaic.version = 11 : i64} {
  func.func @mlp_kernel(%arg0: i32, %arg1: memref<8x32xbf16, #tpu.memory_space<vmem>>, %arg2: memref<32x128xbf16, #tpu.memory_space<vmem>>, %arg3: memref<1x128xf32, #tpu.memory_space<vmem>>, %arg4: memref<128x64xbf16, #tpu.memory_space<vmem>>, %arg5: memref<1x64xf32, #tpu.memory_space<vmem>>, %arg6: memref<64x32xbf16, #tpu.memory_space<vmem>>, %arg7: memref<1x32xf32, #tpu.memory_space<vmem>>, %arg8: memref<32x128xbf16, #tpu.memory_space<vmem>>, %arg9: memref<1x128xf32, #tpu.memory_space<vmem>>, %arg10: memref<8x128xf32, #tpu.memory_space<vmem>>) attributes {dimension_semantics = [#tpu.dimension_semantics<parallel>], iteration_bounds = array<i64: 1>, scalar_prefetch = 0 : i64, scratch_operands = 0 : i64, tpu.core_type = #tpu.core_type<tc>, window_params = [{transform_indices = @transform_0, window_bounds = array<i64: 8, 32>}, {pipeline_mode = #tpu.pipeline_mode<synchronous>, transform_indices = @transform_1, window_bounds = array<i64: 32, 128>}, {pipeline_mode = #tpu.pipeline_mode<synchronous>, transform_indices = @transform_2, window_bounds = array<i64: 1, 128>}, {pipeline_mode = #tpu.pipeline_mode<synchronous>, transform_indices = @transform_3, window_bounds = array<i64: 128, 64>}, {pipeline_mode = #tpu.pipeline_mode<synchronous>, transform_indices = @transform_4, window_bounds = array<i64: 1, 64>}, {pipeline_mode = #tpu.pipeline_mode<synchronous>, transform_indices = @transform_5, window_bounds = array<i64: 64, 32>}, {pipeline_mode = #tpu.pipeline_mode<synchronous>, transform_indices = @transform_6, window_bounds = array<i64: 1, 32>}, {pipeline_mode = #tpu.pipeline_mode<synchronous>, transform_indices = @transform_7, window_bounds = array<i64: 32, 128>}, {pipeline_mode = #tpu.pipeline_mode<synchronous>, transform_indices = @transform_8, window_bounds = array<i64: 1, 128>}, {transform_indices = @transform_9, window_bounds = array<i64: 8, 128>}]} {
    %c0 = arith.constant 0 : index
    %c0_0 = arith.constant 0 : index
    %0 = vector.load %arg1[%c0, %c0_0] : memref<8x32xbf16, #tpu.memory_space<vmem>>, vector<8x32xbf16>
    %c0_1 = arith.constant 0 : index
    %c0_2 = arith.constant 0 : index
    %1 = vector.load %arg2[%c0_1, %c0_2] : memref<32x128xbf16, #tpu.memory_space<vmem>>, vector<32x128xbf16>
    %cst = arith.constant dense<0.000000e+00> : vector<8x128xf32>
    %2 = tpu.matmul %0, %1, %cst {dimension_numbers = #tpu.dot_dimension_numbers<[1], [0], [0], [1], [0, 0, 1, 1], [], []>} : vector<8x32xbf16>, vector<32x128xbf16>, vector<8x128xf32> -> vector<8x128xf32>
    %c0_3 = arith.constant 0 : index
    %c0_4 = arith.constant 0 : index
    %3 = vector.load %arg3[%c0_3, %c0_4] : memref<1x128xf32, #tpu.memory_space<vmem>>, vector<1x128xf32>
    %4 = vector.broadcast %3 : vector<1x128xf32> to vector<8x128xf32>
    %5 = arith.addf %2, %4 : vector<8x128xf32>
    %cst_5 = arith.constant 0.000000e+00 : f32
    %6 = vector.broadcast %cst_5 : f32 to vector<8x128xf32>
    %7 = arith.maximumf %5, %6 : vector<8x128xf32>
    %8 = arith.truncf %7 : vector<8x128xf32> to vector<8x128xbf16>
    %c0_6 = arith.constant 0 : index
    %c0_7 = arith.constant 0 : index
    %9 = vector.load %arg4[%c0_6, %c0_7] : memref<128x64xbf16, #tpu.memory_space<vmem>>, vector<128x64xbf16>
    %cst_8 = arith.constant dense<0.000000e+00> : vector<8x64xf32>
    %10 = tpu.matmul %8, %9, %cst_8 {dimension_numbers = #tpu.dot_dimension_numbers<[1], [0], [0], [1], [0, 0, 1, 1], [], []>} : vector<8x128xbf16>, vector<128x64xbf16>, vector<8x64xf32> -> vector<8x64xf32>
    %c0_9 = arith.constant 0 : index
    %c0_10 = arith.constant 0 : index
    %11 = vector.load %arg5[%c0_9, %c0_10] : memref<1x64xf32, #tpu.memory_space<vmem>>, vector<1x64xf32>
    %12 = vector.broadcast %11 : vector<1x64xf32> to vector<8x64xf32>
    %13 = arith.addf %10, %12 : vector<8x64xf32>
    %cst_11 = arith.constant 0.000000e+00 : f32
    %14 = vector.broadcast %cst_11 : f32 to vector<8x64xf32>
    %15 = arith.maximumf %13, %14 : vector<8x64xf32>
    %16 = arith.truncf %15 : vector<8x64xf32> to vector<8x64xbf16>
    %c0_12 = arith.constant 0 : index
    %c0_13 = arith.constant 0 : index
    %17 = vector.load %arg6[%c0_12, %c0_13] : memref<64x32xbf16, #tpu.memory_space<vmem>>, vector<64x32xbf16>
    %cst_14 = arith.constant dense<0.000000e+00> : vector<8x32xf32>
    %18 = tpu.matmul %16, %17, %cst_14 {dimension_numbers = #tpu.dot_dimension_numbers<[1], [0], [0], [1], [0, 0, 1, 1], [], []>} : vector<8x64xbf16>, vector<64x32xbf16>, vector<8x32xf32> -> vector<8x32xf32>
    %c0_15 = arith.constant 0 : index
    %c0_16 = arith.constant 0 : index
    %19 = vector.load %arg7[%c0_15, %c0_16] : memref<1x32xf32, #tpu.memory_space<vmem>>, vector<1x32xf32>
    %20 = vector.broadcast %19 : vector<1x32xf32> to vector<8x32xf32>
    %21 = arith.addf %18, %20 : vector<8x32xf32>
    %cst_17 = arith.constant 0.000000e+00 : f32
    %22 = vector.broadcast %cst_17 : f32 to vector<8x32xf32>
    %23 = arith.maximumf %21, %22 : vector<8x32xf32>
    %24 = arith.truncf %23 : vector<8x32xf32> to vector<8x32xbf16>
    %c0_18 = arith.constant 0 : index
    %c0_19 = arith.constant 0 : index
    %25 = vector.load %arg8[%c0_18, %c0_19] : memref<32x128xbf16, #tpu.memory_space<vmem>>, vector<32x128xbf16>
    %cst_20 = arith.constant dense<0.000000e+00> : vector<8x128xf32>
    %26 = tpu.matmul %24, %25, %cst_20 {dimension_numbers = #tpu.dot_dimension_numbers<[1], [0], [0], [1], [0, 0, 1, 1], [], []>} : vector<8x32xbf16>, vector<32x128xbf16>, vector<8x128xf32> -> vector<8x128xf32>
    %c0_21 = arith.constant 0 : index
    %c0_22 = arith.constant 0 : index
    %27 = vector.load %arg9[%c0_21, %c0_22] : memref<1x128xf32, #tpu.memory_space<vmem>>, vector<1x128xf32>
    %28 = vector.broadcast %27 : vector<1x128xf32> to vector<8x128xf32>
    %29 = arith.addf %26, %28 : vector<8x128xf32>
    %c0_23 = arith.constant 0 : index
    %c0_24 = arith.constant 0 : index
    %30 = vector.load %arg10[%c0_23, %c0_24] : memref<8x128xf32, #tpu.memory_space<vmem>>, vector<8x128xf32>
    tpu.vector_store %arg10[%c0_23, %c0_24], %29 {strides = array<i32>} : memref<8x128xf32, #tpu.memory_space<vmem>>, vector<8x128xf32>,
    return
  }
  func.func @transform_0(%arg0: i32) -> (i32, i32) {
    %c0_i32 = arith.constant 0 : i32
    %c0_i32_0 = arith.constant 0 : i32
    return %arg0, %c0_i32 : i32, i32
  }
  func.func @transform_1(%arg0: i32) -> (i32, i32) {
    %c0_i32 = arith.constant 0 : i32
    %c0_i32_0 = arith.constant 0 : i32
    %c0_i32_1 = arith.constant 0 : i32
    return %c0_i32, %c0_i32_0 : i32, i32
  }
  func.func @transform_2(%arg0: i32) -> (i32, i32) {
    %c0_i32 = arith.constant 0 : i32
    %c0_i32_0 = arith.constant 0 : i32
    %c0_i32_1 = arith.constant 0 : i32
    return %c0_i32, %c0_i32_0 : i32, i32
  }
  func.func @transform_3(%arg0: i32) -> (i32, i32) {
    %c0_i32 = arith.constant 0 : i32
    %c0_i32_0 = arith.constant 0 : i32
    %c0_i32_1 = arith.constant 0 : i32
    return %c0_i32, %c0_i32_0 : i32, i32
  }
  func.func @transform_4(%arg0: i32) -> (i32, i32) {
    %c0_i32 = arith.constant 0 : i32
    %c0_i32_0 = arith.constant 0 : i32
    %c0_i32_1 = arith.constant 0 : i32
    return %c0_i32, %c0_i32_0 : i32, i32
  }
  func.func @transform_5(%arg0: i32) -> (i32, i32) {
    %c0_i32 = arith.constant 0 : i32
    %c0_i32_0 = arith.constant 0 : i32
    %c0_i32_1 = arith.constant 0 : i32
    return %c0_i32, %c0_i32_0 : i32, i32
  }
  func.func @transform_6(%arg0: i32) -> (i32, i32) {
    %c0_i32 = arith.constant 0 : i32
    %c0_i32_0 = arith.constant 0 : i32
    %c0_i32_1 = arith.constant 0 : i32
    return %c0_i32, %c0_i32_0 : i32, i32
  }
  func.func @transform_7(%arg0: i32) -> (i32, i32) {
    %c0_i32 = arith.constant 0 : i32
    %c0_i32_0 = arith.constant 0 : i32
    %c0_i32_1 = arith.constant 0 : i32
    return %c0_i32, %c0_i32_0 : i32, i32
  }
  func.func @transform_8(%arg0: i32) -> (i32, i32) {
    %c0_i32 = arith.constant 0 : i32
    %c0_i32_0 = arith.constant 0 : i32
    %c0_i32_1 = arith.constant 0 : i32
    return %c0_i32, %c0_i32_0 : i32, i32
  }
  func.func @transform_9(%arg0: i32) -> (i32, i32) {
    %c0_i32 = arith.constant 0 : i32
    %c0_i32_0 = arith.constant 0 : i32
    return %arg0, %c0_i32 : i32, i32
  }
}

</mosaic_0001>

<llo_original>
// kernel: improved_predictor_forward.1
$region0: #{improved_predictor_forward.1}
  #allocation0 [shape = 'u32[]', space=smem, size = 0x4, offset = 0x4, fixed_abs, tag = 'smem constant byte address 0x4 - core index']
  #allocation1 [shape = 'u32[72,128]{1,0:T(1,128)}', space=vmem, size = 0x9000, scoped, tag = 'internal scratch']
  %s0 = inlined_call_operand.vmem [shape: bf16[8,32], index: 0, kind: input, shape index: {}]
  %s1 = inlined_call_operand.vmem [shape: bf16[32,128], index: 1, kind: input, shape index: {}]
  %s2 = inlined_call_operand.vmem [shape: f32[1,128], index: 2, kind: input, shape index: {}]
  %s3 = inlined_call_operand.vmem [shape: bf16[128,64], index: 3, kind: input, shape index: {}]
  %s4 = inlined_call_operand.vmem [shape: f32[1,64], index: 4, kind: input, shape index: {}]
  %s5 = inlined_call_operand.vmem [shape: bf16[64,32], index: 5, kind: input, shape index: {}]
  %s6 = inlined_call_operand.vmem [shape: f32[1,32], index: 6, kind: input, shape index: {}]
  %s7 = inlined_call_operand.vmem [shape: bf16[32,128], index: 7, kind: input, shape index: {}]
  %s8 = inlined_call_operand.vmem [shape: f32[1,128], index: 8, kind: input, shape index: {}]
  %s9 = inlined_call_operand.vmem [shape: f32[8,128], index: 9, kind: output, shape index: {}]
  %s10 = sld [smem:[#allocation0]]
  $region46: #{improved_predictor_forward.1} parent=0
    _
  %s12 = ssub.s32 1, %s10
  %s13 = scalar_select 0, %s12, %s10
  // Predicated region
  $region2: #{improved_predictor_forward.1} parent=0 // pred_check
    _
  $region3: #{improved_predictor_forward.1} parent=0 // pred_check_branch
    %15 = sbr.rel (0) target = $region5
  $region4: #{improved_predictor_forward.1} parent=0 // pred_region
    _
  $region5: #{improved_predictor_forward.1} parent=0 // pred_fallthru
    _
  // Predicated region
  $region6: #{improved_predictor_forward.1} parent=0 // pred_check
    _
  $region7: #{improved_predictor_forward.1} parent=0 // pred_check_branch
    %17 = sbr.rel (0) target = $region9
  $region8: #{improved_predictor_forward.1} parent=0 // pred_region
    _
  $region9: #{improved_predictor_forward.1} parent=0 // pred_fallthru
    _
  // Predicated region
  $region10: #{improved_predictor_forward.1} parent=0 // pred_check
    _
  $region11: #{improved_predictor_forward.1} parent=0 // pred_check_branch
    %19 = sbr.rel (0) target = $region13
  $region12: #{improved_predictor_forward.1} parent=0 // pred_region
    _
  $region13: #{improved_predictor_forward.1} parent=0 // pred_fallthru
    _
  // Predicated region
  $region14: #{improved_predictor_forward.1} parent=0 // pred_check
    _
  $region15: #{improved_predictor_forward.1} parent=0 // pred_check_branch
    %21 = sbr.rel (0) target = $region17
  $region16: #{improved_predictor_forward.1} parent=0 // pred_region
    _
  $region17: #{improved_predictor_forward.1} parent=0 // pred_fallthru
    _
  // Predicated region
  $region18: #{improved_predictor_forward.1} parent=0 // pred_check
    _
  $region19: #{improved_predictor_forward.1} parent=0 // pred_check_branch
    %23 = sbr.rel (0) target = $region21
  $region20: #{improved_predictor_forward.1} parent=0 // pred_region
    _
  $region21: #{improved_predictor_forward.1} parent=0 // pred_fallthru
    _
  // Predicated region
  $region22: #{improved_predictor_forward.1} parent=0 // pred_check
    _
  $region23: #{improved_predictor_forward.1} parent=0 // pred_check_branch
    %25 = sbr.rel (0) target = $region25
  $region24: #{improved_predictor_forward.1} parent=0 // pred_region
    _
  $region25: #{improved_predictor_forward.1} parent=0 // pred_fallthru
    _
  // Predicated region
  $region26: #{improved_predictor_forward.1} parent=0 // pred_check
    _
  $region27: #{improved_predictor_forward.1} parent=0 // pred_check_branch
    %27 = sbr.rel (0) target = $region29
  $region28: #{improved_predictor_forward.1} parent=0 // pred_region
    _
  $region29: #{improved_predictor_forward.1} parent=0 // pred_fallthru
    _
  // Predicated region
  $region30: #{improved_predictor_forward.1} parent=0 // pred_check
    _
  $region31: #{improved_predictor_forward.1} parent=0 // pred_check_branch
    %29 = sbr.rel (0) target = $region33
  $region32: #{improved_predictor_forward.1} parent=0 // pred_region
    _
  $region33: #{improved_predictor_forward.1} parent=0 // pred_fallthru
    _
  // Predicated region
  $region34: #{improved_predictor_forward.1} parent=0 // pred_check
    _
  $region35: #{improved_predictor_forward.1} parent=0 // pred_check_branch
    %31 = sbr.rel (0) target = $region37
  $region36: #{improved_predictor_forward.1} parent=0 // pred_region
    _
  $region37: #{improved_predictor_forward.1} parent=0 // pred_fallthru
    _
  %v33 = vld [vmem:[%s0] sm:$0xf]
  %v34 = vld [vmem:[%s1] sm:$0xf]
  %v35 = vld [vmem:[%s1 + $0x4] sm:$0xf]
  %v36 = vld [vmem:[%s1 + $0x8] sm:$0xf]
  %v37 = vld [vmem:[%s1 + $0xc] sm:$0xf]
  %v38 = vld [vmem:[%s2] sm:$0x1]
  %v40 = vperm.slane %v38, 0
  %v46 = vunpack.c.l.b16 %v34
  %v47 = vunpack.c.l.b16 %v35
  %v48 = vunpack.c.l.b16 %v36
  %v49 = vunpack.c.l.b16 %v37
  %v50 = vpack.c.b16 %v47, %v46
  %v51 = vpack.c.b16 %v49, %v48
  %vm54 = vcmask 261120
  %v56 = vsel %vm54, %v33, 0
  %58 = vmatpush.bf16.msra.mxu0 0
  %59 = vmatpush.bf16.msra.mxu0 0
  %60 = vmatpush.bf16.msra.mxu0 0
  %61 = vmatpush.bf16.msra.mxu0 0
  %62 = vmatpush.bf16.msra.mxu0 0
  %63 = vmatpush.bf16.msra.mxu0 0
  %64 = vmatpush.bf16.msra.mxu0 %v51
  %65 = vmatpush.bf16.msra.mxu0 %v50
  %66 = vmatmul.bf16.gmra.mxu0 %v56
  %v67 = vpop.f32.mrf.mxu0
  %v68 = vadd.f32 %v40, %v67
  %v69 = vpop.f32.mrf.mxu0
  %70 = vdwg.mxu0
  %v71 = vmax.f32 %v68, 0.0
  %v72 = vpack.c.bf16 %v71, %v71
  %v73 = vld [vmem:[%s3] sm:$0xf]
  %v74 = vld [vmem:[%s3 + $0x4] sm:$0xf]
  %v75 = vld [vmem:[%s3 + $0x8] sm:$0xf]
  %v76 = vld [vmem:[%s3 + $0xc] sm:$0xf]
  %v77 = vld [vmem:[%s3 + $0x10] sm:$0xf]
  %v78 = vld [vmem:[%s3 + $0x14] sm:$0xf]
  %v79 = vld [vmem:[%s3 + $0x18] sm:$0xf]
  %v80 = vld [vmem:[%s3 + $0x1c] sm:$0xf]
  %v81 = vld [vmem:[%s3 + $0x20] sm:$0xf]
  %v82 = vld [vmem:[%s3 + $0x24] sm:$0xf]
  %v83 = vld [vmem:[%s3 + $0x28] sm:$0xf]
  %v84 = vld [vmem:[%s3 + $0x2c] sm:$0xf]
  %v85 = vld [vmem:[%s3 + $0x30] sm:$0xf]
  %v86 = vld [vmem:[%s3 + $0x34] sm:$0xf]
  %v87 = vld [vmem:[%s3 + $0x38] sm:$0xf]
  %v88 = vld [vmem:[%s3 + $0x3c] sm:$0xf]
  %v89 = vld [vmem:[%s4] sm:$0x1]
  %v91 = vperm.slane %v89, 0
  %v109 = vunpack.c.l.b16 %v73
  %v110 = vunpack.c.l.b16 %v74
  %v111 = vunpack.c.l.b16 %v75
  %v112 = vunpack.c.l.b16 %v76
  %v113 = vunpack.c.l.b16 %v77
  %v114 = vunpack.c.l.b16 %v78
  %v115 = vunpack.c.l.b16 %v79
  %v116 = vunpack.c.l.b16 %v80
  %v117 = vunpack.c.l.b16 %v81
  %v118 = vunpack.c.l.b16 %v82
  %v119 = vunpack.c.l.b16 %v83
  %v120 = vunpack.c.l.b16 %v84
  %v121 = vunpack.c.l.b16 %v85
  %v122 = vunpack.c.l.b16 %v86
  %v123 = vunpack.c.l.b16 %v87
  %v124 = vunpack.c.l.b16 %v88
  %v125 = vpack.c.b16 %v110, %v109
  %v126 = vpack.c.b16 %v112, %v111
  %v127 = vpack.c.b16 %v114, %v113
  %v128 = vpack.c.b16 %v116, %v115
  %v129 = vpack.c.b16 %v118, %v117
  %v130 = vpack.c.b16 %v120, %v119
  %v131 = vpack.c.b16 %v122, %v121
  %v132 = vpack.c.b16 %v124, %v123
  %141 = vmatpush.bf16.msra.mxu0 %v132
  %142 = vmatpush.bf16.msra.mxu0 %v131
  %143 = vmatpush.bf16.msra.mxu0 %v130
  %144 = vmatpush.bf16.msra.mxu0 %v129
  %145 = vmatpush.bf16.msra.mxu0 %v128
  %146 = vmatpush.bf16.msra.mxu0 %v127
  %147 = vmatpush.bf16.msra.mxu0 %v126
  %148 = vmatpush.bf16.msra.mxu0 %v125
  %149 = vmatmul.bf16.gmra.mxu0 %v72
  %v150 = vpop.f32.mrf.mxu0
  %v151 = vadd.f32 %v91, %v150
  %v152 = vpop.f32.mrf.mxu0
  %153 = vdwg.mxu0
  %v154 = vmax.f32 %v151, 0.0
  %v155 = vpack.c.bf16 %v154, %v154
  %v156 = vld [vmem:[%s5] sm:$0xf]
  %v157 = vld [vmem:[%s5 + $0x4] sm:$0xf]
  %v158 = vld [vmem:[%s5 + $0x8] sm:$0xf]
  %v159 = vld [vmem:[%s5 + $0xc] sm:$0xf]
  %v160 = vld [vmem:[%s5 + $0x10] sm:$0xf]
  %v161 = vld [vmem:[%s5 + $0x14] sm:$0xf]
  %v162 = vld [vmem:[%s5 + $0x18] sm:$0xf]
  %v163 = vld [vmem:[%s5 + $0x1c] sm:$0xf]
  %v164 = vld [vmem:[%s6] sm:$0x1]
  %v166 = vperm.slane %v164, 0
  %v176 = vunpack.c.l.b16 %v156
  %v177 = vunpack.c.l.b16 %v157
  %v178 = vunpack.c.l.b16 %v158
  %v179 = vunpack.c.l.b16 %v159
  %v180 = vunpack.c.l.b16 %v160
  %v181 = vunpack.c.l.b16 %v161
  %v182 = vunpack.c.l.b16 %v162
  %v183 = vunpack.c.l.b16 %v163
  %v184 = vpack.c.b16 %v177, %v176
  %v185 = vpack.c.b16 %v179, %v178
  %v186 = vpack.c.b16 %v181, %v180
  %v187 = vpack.c.b16 %v183, %v182
  %vm192 = vcmask 523264
  %v194 = vsel %vm192, %v155, 0
  %196 = vmatpush.bf16.msra.mxu0 0
  %197 = vmatpush.bf16.msra.mxu0 0
  %198 = vmatpush.bf16.msra.mxu0 0
  %199 = vmatpush.bf16.msra.mxu0 0
  %200 = vmatpush.bf16.msra.mxu0 %v187
  %201 = vmatpush.bf16.msra.mxu0 %v186
  %202 = vmatpush.bf16.msra.mxu0 %v185
  %203 = vmatpush.bf16.msra.mxu0 %v184
  %204 = vmatmul.bf16.gmra.mxu0 %v194
  %v205 = vpop.f32.mrf.mxu0
  %v206 = vadd.f32 %v166, %v205
  %v207 = vpop.f32.mrf.mxu0
  %208 = vdwg.mxu0
  %v209 = vmax.f32 %v206, 0.0
  %v210 = vpack.c.bf16 %v209, %v209
  %v211 = vld [vmem:[%s7] sm:$0xf]
  %v212 = vld [vmem:[%s7 + $0x4] sm:$0xf]
  %v213 = vld [vmem:[%s7 + $0x8] sm:$0xf]
  %v214 = vld [vmem:[%s7 + $0xc] sm:$0xf]
  %v215 = vld [vmem:[%s8] sm:$0x1]
  %v217 = vperm.slane %v215, 0
  %v223 = vunpack.c.l.b16 %v211
  %v224 = vunpack.c.l.b16 %v212
  %v225 = vunpack.c.l.b16 %v213
  %v226 = vunpack.c.l.b16 %v214
  %v227 = vpack.c.b16 %v224, %v223
  %v228 = vpack.c.b16 %v226, %v225
  %v232 = vsel %vm54, %v210, 0
  %234 = vmatpush.bf16.msra.mxu0 0
  %235 = vmatpush.bf16.msra.mxu0 0
  %236 = vmatpush.bf16.msra.mxu0 0
  %237 = vmatpush.bf16.msra.mxu0 0
  %238 = vmatpush.bf16.msra.mxu0 0
  %239 = vmatpush.bf16.msra.mxu0 0
  %240 = vmatpush.bf16.msra.mxu0 %v228
  %241 = vmatpush.bf16.msra.mxu0 %v227
  %242 = vmatmul.bf16.gmra.mxu0 %v232
  %v243 = vpop.f32.mrf.mxu0
  %v244 = vadd.f32 %v217, %v243
  %v245 = vpop.f32.mrf.mxu0
  %246 = vdwg.mxu0
  %247 = vst [vmem:[%s9] sm:$0xff] %v244
  // Predicated region
  $region38: #{improved_predictor_forward.1} parent=0 // pred_check
    _
  $region39: #{improved_predictor_forward.1} parent=0 // pred_check_branch
    %249 = sbr.rel (0) target = $region41
  $region40: #{improved_predictor_forward.1} parent=0 // pred_region
    _
  $region41: #{improved_predictor_forward.1} parent=0 // pred_fallthru
    _
  // Predicated region
  $region42: #{improved_predictor_forward.1} parent=0 // pred_check
    _
  $region43: #{improved_predictor_forward.1} parent=0 // pred_check_branch
    %251 = sbr.rel (0) target = $region45
  $region44: #{improved_predictor_forward.1} parent=0 // pred_region
    _
  $region45: #{improved_predictor_forward.1} parent=0 // pred_fallthru
    _

</llo_original>
